<compile_context>
chip_gen: v6e
topology: v6e:2x2x1
jax: 0.10.0
libtpu: 0.0.40
codegen_flags: <defaults>
</compile_context>

<pallas_src>
import functools

import jax
import jax.numpy as jnp
from jax.experimental import pallas as pl
from jax.experimental.pallas import tpu as pltpu


def _round_up(n: int, m: int) -> int:
    return ((n + m - 1) // m) * m


def mlp_kernel(x_ref, w1_ref, b1_ref, w2_ref, b2_ref, w3_ref, b3_ref, o_ref):
    x = x_ref[...]
    cdt = x.dtype  # compute dtype for MXU inputs (f32 or bf16)

    # fc1 + ReLU  (f32 accumulate, bias added in f32, ReLU in f32)
    h1 = jnp.dot(x, w1_ref[...], preferred_element_type=jnp.float32) + b1_ref[...]
    h1 = jnp.maximum(h1, 0.0).astype(cdt)

    # fc2 + ReLU
    h2 = jnp.dot(h1, w2_ref[...], preferred_element_type=jnp.float32) + b2_ref[...]
    h2 = jnp.maximum(h2, 0.0).astype(cdt)

    # fc3 (no activation)
    out = jnp.dot(h2, w3_ref[...], preferred_element_type=jnp.float32) + b3_ref[...]
    o_ref[...] = out.astype(o_ref.dtype)


def quantity_mlp_forward(x, params, *, compute_dtype=jnp.float32, tile_b=256):
    """x: (B, ...) -> flattened to (B, input_size). Returns (B, output_size) f32."""
    w1, b1, w2, b2, w3, b3 = params
    B = x.shape[0]
    x2d = x.reshape(B, -1).astype(jnp.float32)
    in_size = x2d.shape[1]
    hid = w1.shape[1]
    out_size = w3.shape[1]

    LANE = 128
    hid_p = _round_up(hid, LANE)   # lane-dense hidden
    out_p = _round_up(out_size, LANE)  # lane-dense output (unmasked stores)

    # Batch tiling: biggest tile up to `tile_b`, rounded to the 8-sublane grain.
    tile_b_eff = min(tile_b, _round_up(B, 8))
    b_p = _round_up(B, tile_b_eff)
    grid = (b_p // tile_b_eff,)

    # Zero-pad (mathematically exact for this MLP; padded rows/cols sliced away).
    xp = jnp.zeros((b_p, in_size), jnp.float32).at[:B].set(x2d)
    w1p = jnp.zeros((in_size, hid_p), jnp.float32).at[:, :hid].set(w1)
    b1p = jnp.zeros((1, hid_p), jnp.float32).at[:, :hid].set(b1)
    w2p = jnp.zeros((hid_p, hid_p), jnp.float32).at[:hid, :hid].set(w2)
    b2p = jnp.zeros((1, hid_p), jnp.float32).at[:, :hid].set(b2)
    w3p = jnp.zeros((hid_p, out_p), jnp.float32).at[:hid, :out_size].set(w3)
    b3p = jnp.zeros((1, out_p), jnp.float32).at[:, :out_size].set(b3)

    # MXU-friendly dtype for dot inputs; biases stay f32 (f32 accumulation).
    xp = xp.astype(compute_dtype)
    w1p = w1p.astype(compute_dtype)
    w2p = w2p.astype(compute_dtype)
    w3p = w3p.astype(compute_dtype)

    flops = 2 * b_p * (in_size * hid_p + hid_p * hid_p + hid_p * out_p)
    bytes_accessed = sum(
        int(a.size) * a.dtype.itemsize
        for a in (xp, w1p, b1p, w2p, b2p, w3p, b3p)
    ) + b_p * out_p * 4  # f32 output

    out_padded = pl.pallas_call(
        mlp_kernel,
        out_shape=jax.ShapeDtypeStruct((b_p, out_p), jnp.float32),
        grid=grid,
        in_specs=[
            pl.BlockSpec((tile_b_eff, in_size), lambda i: (i, 0)),  # x: tiled over batch
            pl.BlockSpec((in_size, hid_p), lambda i: (0, 0)),       # w1: VMEM-resident
            pl.BlockSpec((1, hid_p), lambda i: (0, 0)),             # b1
            pl.BlockSpec((hid_p, hid_p), lambda i: (0, 0)),         # w2
            pl.BlockSpec((1, hid_p), lambda i: (0, 0)),             # b2
            pl.BlockSpec((hid_p, out_p), lambda i: (0, 0)),         # w3
            pl.BlockSpec((1, out_p), lambda i: (0, 0)),             # b3
        ],
        out_specs=pl.BlockSpec((tile_b_eff, out_p), lambda i: (i, 0)),
        compiler_params=pltpu.CompilerParams(
            dimension_semantics=("parallel",),  # v7x: shard batch grid over 2 TCs
        ),
        cost_estimate=pl.CostEstimate(
            flops=flops, transcendentals=0, bytes_accessed=bytes_accessed
        ),
    )(xp, w1p, b1p, w2p, b2p, w3p, b3p)

    return out_padded[:B, :out_size]


def init_params(key, input_size, hidden_size, output_size):
    """Deterministic init mimicking nn.Linear's uniform(-1/sqrt(fan_in), 1/sqrt(fan_in))."""
    ks = jax.random.split(key, 6)

    def linear(kw, kb, fan_in, fan_out):
        bound = 1.0 / jnp.sqrt(jnp.float32(fan_in))
        w = jax.random.uniform(kw, (fan_in, fan_out), jnp.float32, -bound, bound)
        b = jax.random.uniform(kb, (1, fan_out), jnp.float32, -bound, bound)
        return w, b

    w1, b1 = linear(ks[0], ks[1], input_size, hidden_size)
    w2, b2 = linear(ks[2], ks[3], hidden_size, hidden_size)
    w3, b3 = linear(ks[4], ks[5], hidden_size, output_size)
    return (w1, b1, w2, b2, w3, b3)


if __name__ == "__main__":
    key = jax.random.PRNGKey(0)
    k_x, k_p = jax.random.split(key)

    # Small shapes consistent with the forward pass:
    # raw input (batch, channels, spatial, spatial) -> flattened to input_size
    batch, channels, spatial = 2, 4, 4
    input_size = channels * spatial * spatial  # 64
    hidden_size = 32
    output_size = 8

    x = jax.random.normal(k_x, (batch, channels, spatial, spatial), jnp.float32)
    params = init_params(k_p, input_size, hidden_size, output_size)

    # Pure-JAX reference
    w1, b1, w2, b2, w3, b3 = params
    x2d = x.reshape(batch, -1)
    ref = jnp.maximum(x2d @ w1 + b1, 0.0)
    ref = jnp.maximum(ref @ w2 + b2, 0.0)
    ref = ref @ w3 + b3

    # f32 compute path: exact (tight tolerance)
    fwd_f32 = jax.jit(functools.partial(quantity_mlp_forward, compute_dtype=jnp.float32))
    out = jax.block_until_ready(fwd_f32(x, params))
    assert out.shape == (batch, output_size)
    assert jnp.allclose(out, ref, atol=1e-5, rtol=1e-5)

    # bf16 MXU path (f32 accumulation): loose tolerance
    fwd_bf16 = jax.jit(functools.partial(quantity_mlp_forward, compute_dtype=jnp.bfloat16))
    out_bf16 = jax.block_until_ready(fwd_bf16(x, params))
    assert out_bf16.shape == (batch, output_size)
    assert jnp.allclose(out_bf16, ref, atol=1e-1, rtol=1e-1)

    print("KERNEL_OK")
</pallas_src>

<mosaic_0001>
module attributes {stable_mosaic.version = 11 : i64} {
  func.func @mlp_kernel(%arg0: i32, %arg1: memref<8x64xf32, #tpu.memory_space<vmem>>, %arg2: memref<64x128xf32, #tpu.memory_space<vmem>>, %arg3: memref<1x128xf32, #tpu.memory_space<vmem>>, %arg4: memref<128x128xf32, #tpu.memory_space<vmem>>, %arg5: memref<1x128xf32, #tpu.memory_space<vmem>>, %arg6: memref<128x128xf32, #tpu.memory_space<vmem>>, %arg7: memref<1x128xf32, #tpu.memory_space<vmem>>, %arg8: memref<8x128xf32, #tpu.memory_space<vmem>>) attributes {dimension_semantics = [#tpu.dimension_semantics<parallel>], iteration_bounds = array<i64: 1>, scalar_prefetch = 0 : i64, scratch_operands = 0 : i64, tpu.core_type = #tpu.core_type<tc>, window_params = [{transform_indices = @transform_0, window_bounds = array<i64: 8, 64>}, {pipeline_mode = #tpu.pipeline_mode<synchronous>, transform_indices = @transform_1, window_bounds = array<i64: 64, 128>}, {pipeline_mode = #tpu.pipeline_mode<synchronous>, transform_indices = @transform_2, window_bounds = array<i64: 1, 128>}, {pipeline_mode = #tpu.pipeline_mode<synchronous>, transform_indices = @transform_3, window_bounds = array<i64: 128, 128>}, {pipeline_mode = #tpu.pipeline_mode<synchronous>, transform_indices = @transform_4, window_bounds = array<i64: 1, 128>}, {pipeline_mode = #tpu.pipeline_mode<synchronous>, transform_indices = @transform_5, window_bounds = array<i64: 128, 128>}, {pipeline_mode = #tpu.pipeline_mode<synchronous>, transform_indices = @transform_6, window_bounds = array<i64: 1, 128>}, {transform_indices = @transform_7, window_bounds = array<i64: 8, 128>}]} {
    %c0 = arith.constant 0 : index
    %c0_0 = arith.constant 0 : index
    %0 = vector.load %arg1[%c0, %c0_0] : memref<8x64xf32, #tpu.memory_space<vmem>>, vector<8x64xf32>
    %c0_1 = arith.constant 0 : index
    %c0_2 = arith.constant 0 : index
    %1 = vector.load %arg2[%c0_1, %c0_2] : memref<64x128xf32, #tpu.memory_space<vmem>>, vector<64x128xf32>
    %cst = arith.constant dense<0.000000e+00> : vector<8x128xf32>
    %2 = tpu.matmul %0, %1, %cst {dimension_numbers = #tpu.dot_dimension_numbers<[1], [0], [0], [1], [0, 0, 1, 1], [], []>} : vector<8x64xf32>, vector<64x128xf32>, vector<8x128xf32> -> vector<8x128xf32>
    %c0_3 = arith.constant 0 : index
    %c0_4 = arith.constant 0 : index
    %3 = vector.load %arg3[%c0_3, %c0_4] : memref<1x128xf32, #tpu.memory_space<vmem>>, vector<1x128xf32>
    %4 = vector.broadcast %3 : vector<1x128xf32> to vector<8x128xf32>
    %5 = arith.addf %2, %4 : vector<8x128xf32>
    %cst_5 = arith.constant 0.000000e+00 : f32
    %6 = vector.broadcast %cst_5 : f32 to vector<8x128xf32>
    %7 = arith.maximumf %5, %6 : vector<8x128xf32>
    %c0_6 = arith.constant 0 : index
    %c0_7 = arith.constant 0 : index
    %8 = vector.load %arg4[%c0_6, %c0_7] : memref<128x128xf32, #tpu.memory_space<vmem>>, vector<128x128xf32>
    %cst_8 = arith.constant dense<0.000000e+00> : vector<8x128xf32>
    %9 = tpu.matmul %7, %8, %cst_8 {dimension_numbers = #tpu.dot_dimension_numbers<[1], [0], [0], [1], [0, 0, 1, 1], [], []>} : vector<8x128xf32>, vector<128x128xf32>, vector<8x128xf32> -> vector<8x128xf32>
    %c0_9 = arith.constant 0 : index
    %c0_10 = arith.constant 0 : index
    %10 = vector.load %arg5[%c0_9, %c0_10] : memref<1x128xf32, #tpu.memory_space<vmem>>, vector<1x128xf32>
    %11 = vector.broadcast %10 : vector<1x128xf32> to vector<8x128xf32>
    %12 = arith.addf %9, %11 : vector<8x128xf32>
    %cst_11 = arith.constant 0.000000e+00 : f32
    %13 = vector.broadcast %cst_11 : f32 to vector<8x128xf32>
    %14 = arith.maximumf %12, %13 : vector<8x128xf32>
    %c0_12 = arith.constant 0 : index
    %c0_13 = arith.constant 0 : index
    %15 = vector.load %arg6[%c0_12, %c0_13] : memref<128x128xf32, #tpu.memory_space<vmem>>, vector<128x128xf32>
    %cst_14 = arith.constant dense<0.000000e+00> : vector<8x128xf32>
    %16 = tpu.matmul %14, %15, %cst_14 {dimension_numbers = #tpu.dot_dimension_numbers<[1], [0], [0], [1], [0, 0, 1, 1], [], []>} : vector<8x128xf32>, vector<128x128xf32>, vector<8x128xf32> -> vector<8x128xf32>
    %c0_15 = arith.constant 0 : index
    %c0_16 = arith.constant 0 : index
    %17 = vector.load %arg7[%c0_15, %c0_16] : memref<1x128xf32, #tpu.memory_space<vmem>>, vector<1x128xf32>
    %18 = vector.broadcast %17 : vector<1x128xf32> to vector<8x128xf32>
    %19 = arith.addf %16, %18 : vector<8x128xf32>
    %c0_17 = arith.constant 0 : index
    %c0_18 = arith.constant 0 : index
    %20 = vector.load %arg8[%c0_17, %c0_18] : memref<8x128xf32, #tpu.memory_space<vmem>>, vector<8x128xf32>
    tpu.vector_store %arg8[%c0_17, %c0_18], %19 {strides = array<i32>} : memref<8x128xf32, #tpu.memory_space<vmem>>, vector<8x128xf32>,
    return
  }
  func.func @transform_0(%arg0: i32) -> (i32, i32) {
    %c0_i32 = arith.constant 0 : i32
    %c0_i32_0 = arith.constant 0 : i32
    return %arg0, %c0_i32 : i32, i32
  }
  func.func @transform_1(%arg0: i32) -> (i32, i32) {
    %c0_i32 = arith.constant 0 : i32
    %c0_i32_0 = arith.constant 0 : i32
    %c0_i32_1 = arith.constant 0 : i32
    return %c0_i32, %c0_i32_0 : i32, i32
  }
  func.func @transform_2(%arg0: i32) -> (i32, i32) {
    %c0_i32 = arith.constant 0 : i32
    %c0_i32_0 = arith.constant 0 : i32
    %c0_i32_1 = arith.constant 0 : i32
    return %c0_i32, %c0_i32_0 : i32, i32
  }
  func.func @transform_3(%arg0: i32) -> (i32, i32) {
    %c0_i32 = arith.constant 0 : i32
    %c0_i32_0 = arith.constant 0 : i32
    %c0_i32_1 = arith.constant 0 : i32
    return %c0_i32, %c0_i32_0 : i32, i32
  }
  func.func @transform_4(%arg0: i32) -> (i32, i32) {
    %c0_i32 = arith.constant 0 : i32
    %c0_i32_0 = arith.constant 0 : i32
    %c0_i32_1 = arith.constant 0 : i32
    return %c0_i32, %c0_i32_0 : i32, i32
  }
  func.func @transform_5(%arg0: i32) -> (i32, i32) {
    %c0_i32 = arith.constant 0 : i32
    %c0_i32_0 = arith.constant 0 : i32
    %c0_i32_1 = arith.constant 0 : i32
    return %c0_i32, %c0_i32_0 : i32, i32
  }
  func.func @transform_6(%arg0: i32) -> (i32, i32) {
    %c0_i32 = arith.constant 0 : i32
    %c0_i32_0 = arith.constant 0 : i32
    %c0_i32_1 = arith.constant 0 : i32
    return %c0_i32, %c0_i32_0 : i32, i32
  }
  func.func @transform_7(%arg0: i32) -> (i32, i32) {
    %c0_i32 = arith.constant 0 : i32
    %c0_i32_0 = arith.constant 0 : i32
    return %arg0, %c0_i32 : i32, i32
  }
}

</mosaic_0001>

<llo_original>
// kernel: quantity_mlp_forward.1
$region0: #{quantity_mlp_forward.1}
  #allocation0 [shape = 'u32[]', space=smem, size = 0x4, offset = 0x4, fixed_abs, tag = 'smem constant byte address 0x4 - core index']
  #allocation1 [shape = 'u32[144,128]{1,0:T(1,128)}', space=vmem, size = 0x12000, scoped, tag = 'internal scratch']
  %s0 = inlined_call_operand.vmem [shape: f32[8,64], index: 0, kind: input, shape index: {}]
  %s1 = inlined_call_operand.vmem [shape: f32[64,128], index: 1, kind: input, shape index: {}]
  %s2 = inlined_call_operand.vmem [shape: f32[1,128], index: 2, kind: input, shape index: {}]
  %s3 = inlined_call_operand.vmem [shape: f32[128,128], index: 3, kind: input, shape index: {}]
  %s4 = inlined_call_operand.vmem [shape: f32[1,128], index: 4, kind: input, shape index: {}]
  %s5 = inlined_call_operand.vmem [shape: f32[128,128], index: 5, kind: input, shape index: {}]
  %s6 = inlined_call_operand.vmem [shape: f32[1,128], index: 6, kind: input, shape index: {}]
  %s7 = inlined_call_operand.vmem [shape: f32[8,128], index: 7, kind: output, shape index: {}]
  %s8 = sld [smem:[#allocation0]]
  $region38: #{quantity_mlp_forward.1} parent=0
    _
  %s10 = ssub.s32 1, %s8
  %s11 = scalar_select 0, %s10, %s8
  // Predicated region
  $region2: #{quantity_mlp_forward.1} parent=0 // pred_check
    _
  $region3: #{quantity_mlp_forward.1} parent=0 // pred_check_branch
    %13 = sbr.rel (0) target = $region5
  $region4: #{quantity_mlp_forward.1} parent=0 // pred_region
    _
  $region5: #{quantity_mlp_forward.1} parent=0 // pred_fallthru
    _
  // Predicated region
  $region6: #{quantity_mlp_forward.1} parent=0 // pred_check
    _
  $region7: #{quantity_mlp_forward.1} parent=0 // pred_check_branch
    %15 = sbr.rel (0) target = $region9
  $region8: #{quantity_mlp_forward.1} parent=0 // pred_region
    _
  $region9: #{quantity_mlp_forward.1} parent=0 // pred_fallthru
    _
  // Predicated region
  $region10: #{quantity_mlp_forward.1} parent=0 // pred_check
    _
  $region11: #{quantity_mlp_forward.1} parent=0 // pred_check_branch
    %17 = sbr.rel (0) target = $region13
  $region12: #{quantity_mlp_forward.1} parent=0 // pred_region
    _
  $region13: #{quantity_mlp_forward.1} parent=0 // pred_fallthru
    _
  // Predicated region
  $region14: #{quantity_mlp_forward.1} parent=0 // pred_check
    _
  $region15: #{quantity_mlp_forward.1} parent=0 // pred_check_branch
    %19 = sbr.rel (0) target = $region17
  $region16: #{quantity_mlp_forward.1} parent=0 // pred_region
    _
  $region17: #{quantity_mlp_forward.1} parent=0 // pred_fallthru
    _
  // Predicated region
  $region18: #{quantity_mlp_forward.1} parent=0 // pred_check
    _
  $region19: #{quantity_mlp_forward.1} parent=0 // pred_check_branch
    %21 = sbr.rel (0) target = $region21
  $region20: #{quantity_mlp_forward.1} parent=0 // pred_region
    _
  $region21: #{quantity_mlp_forward.1} parent=0 // pred_fallthru
    _
  // Predicated region
  $region22: #{quantity_mlp_forward.1} parent=0 // pred_check
    _
  $region23: #{quantity_mlp_forward.1} parent=0 // pred_check_branch
    %23 = sbr.rel (0) target = $region25
  $region24: #{quantity_mlp_forward.1} parent=0 // pred_region
    _
  $region25: #{quantity_mlp_forward.1} parent=0 // pred_fallthru
    _
  // Predicated region
  $region26: #{quantity_mlp_forward.1} parent=0 // pred_check
    _
  $region27: #{quantity_mlp_forward.1} parent=0 // pred_check_branch
    %25 = sbr.rel (0) target = $region29
  $region28: #{quantity_mlp_forward.1} parent=0 // pred_region
    _
  $region29: #{quantity_mlp_forward.1} parent=0 // pred_fallthru
    _
  %v26 = vld [vmem:[%s0] sm:$0xff]
  %v27 = vld [vmem:[%s1] sm:$0xff]
  %v28 = vld [vmem:[%s1 + $0x8] sm:$0xff]
  %v29 = vld [vmem:[%s1 + $0x10] sm:$0xff]
  %v30 = vld [vmem:[%s1 + $0x18] sm:$0xff]
  %v31 = vld [vmem:[%s1 + $0x20] sm:$0xff]
  %v32 = vld [vmem:[%s1 + $0x28] sm:$0xff]
  %v33 = vld [vmem:[%s1 + $0x30] sm:$0xff]
  %v34 = vld [vmem:[%s1 + $0x38] sm:$0xff]
  %v35 = vld [vmem:[%s2] sm:$0x1]
  %v37 = vlaneseq
  %v38 = vshrl.u32 %v37, 7
  %v39 = vsub.s32 0, %v38
  %v40 = vrot.slane %v35, %v39
  %vm42 = vcmask 523264
  %v44 = vsel %vm42, %v26, 0
  %46 = vmatprep.subr.mxu0 0.0
  %47 = vmatpush1.msra.mxu0 0.0
  %48 = vmatprep.subr.mxu0 0.0
  %49 = vmatpush1.msra.mxu0 0.0
  %50 = vmatprep.subr.mxu0 0.0
  %51 = vmatpush1.msra.mxu0 0.0
  %52 = vmatprep.subr.mxu0 0.0
  %53 = vmatpush1.msra.mxu0 0.0
  %54 = vmatprep.subr.mxu0 0.0
  %55 = vmatpush1.msra.mxu0 0.0
  %56 = vmatprep.subr.mxu0 0.0
  %57 = vmatpush1.msra.mxu0 0.0
  %58 = vmatprep.subr.mxu0 0.0
  %59 = vmatpush1.msra.mxu0 0.0
  %60 = vmatprep.subr.mxu0 0.0
  %61 = vmatpush1.msra.mxu0 0.0
  %62 = vmatprep.subr.mxu0 0.0
  %63 = vmatpush1.msra.mxu0 %v34
  %64 = vmatprep.subr.mxu0 0.0
  %65 = vmatpush1.msra.mxu0 %v33
  %66 = vmatprep.subr.mxu0 0.0
  %67 = vmatpush1.msra.mxu0 %v32
  %68 = vmatprep.subr.mxu0 0.0
  %69 = vmatpush1.msra.mxu0 %v31
  %70 = vmatprep.subr.mxu0 0.0
  %71 = vmatpush1.msra.mxu0 %v30
  %72 = vmatprep.subr.mxu0 0.0
  %73 = vmatpush1.msra.mxu0 %v29
  %74 = vmatprep.subr.mxu0 0.0
  %75 = vmatpush1.msra.mxu0 %v28
  %76 = vmatprep.subr.mxu0 0.0
  %77 = vmatpush1.msra.mxu0 %v27
  %78 = vmatprep.subr.mxu0 0.0
  %79 = vmatpush2.msra.mxu0 0.0
  %80 = vmatprep.subr.mxu0 0.0
  %81 = vmatpush2.msra.mxu0 0.0
  %82 = vmatprep.subr.mxu0 0.0
  %83 = vmatpush2.msra.mxu0 0.0
  %84 = vmatprep.subr.mxu0 0.0
  %85 = vmatpush2.msra.mxu0 0.0
  %86 = vmatprep.subr.mxu0 0.0
  %87 = vmatpush2.msra.mxu0 0.0
  %88 = vmatprep.subr.mxu0 0.0
  %89 = vmatpush2.msra.mxu0 0.0
  %90 = vmatprep.subr.mxu0 0.0
  %91 = vmatpush2.msra.mxu0 0.0
  %92 = vmatprep.subr.mxu0 0.0
  %93 = vmatpush2.msra.mxu0 0.0
  %94 = vmatprep.subr.mxu0 0.0
  %95 = vmatpush2.msra.mxu0 0.0
  %96 = vmatprep.subr.mxu0 0.0
  %97 = vmatpush2.msra.mxu0 0.0
  %98 = vmatprep.subr.mxu0 0.0
  %99 = vmatpush2.msra.mxu0 0.0
  %100 = vmatprep.subr.mxu0 0.0
  %101 = vmatpush2.msra.mxu0 0.0
  %102 = vmatprep.subr.mxu0 0.0
  %103 = vmatpush2.msra.mxu0 0.0
  %104 = vmatprep.subr.mxu0 0.0
  %105 = vmatpush2.msra.mxu0 0.0
  %106 = vmatprep.subr.mxu0 0.0
  %107 = vmatpush2.msra.mxu0 0.0
  %108 = vmatprep.subr.mxu0 0.0
  %109 = vmatpush2.msra.mxu0 0.0
  %110 = vmatprep.mubr.f32.mxu0 0.0
  %111 = vmatmul.mubr.f32.gmra.mxu0 %v44
  %v112 = vpop.f32.mrf.mxu0
  %v113 = vadd.f32 %v40, %v112
  %v114 = vpop.f32.mrf.mxu0
  %115 = vdwg.mxu0
  %v116 = vmax.f32 %v113, 0.0
  %v117 = vld [vmem:[%s3] sm:$0xff]
  %v118 = vld [vmem:[%s3 + $0x8] sm:$0xff]
  %v119 = vld [vmem:[%s3 + $0x10] sm:$0xff]
  %v120 = vld [vmem:[%s3 + $0x18] sm:$0xff]
  %v121 = vld [vmem:[%s3 + $0x20] sm:$0xff]
  %v122 = vld [vmem:[%s3 + $0x28] sm:$0xff]
  %v123 = vld [vmem:[%s3 + $0x30] sm:$0xff]
  %v124 = vld [vmem:[%s3 + $0x38] sm:$0xff]
  %v125 = vld [vmem:[%s3 + $0x40] sm:$0xff]
  %v126 = vld [vmem:[%s3 + $0x48] sm:$0xff]
  %v127 = vld [vmem:[%s3 + $0x50] sm:$0xff]
  %v128 = vld [vmem:[%s3 + $0x58] sm:$0xff]
  %v129 = vld [vmem:[%s3 + $0x60] sm:$0xff]
  %v130 = vld [vmem:[%s3 + $0x68] sm:$0xff]
  %v131 = vld [vmem:[%s3 + $0x70] sm:$0xff]
  %v132 = vld [vmem:[%s3 + $0x78] sm:$0xff]
  %v133 = vld [vmem:[%s4] sm:$0x1]
  %v135 = vlaneseq
  %v136 = vshrl.u32 %v135, 7
  %v137 = vsub.s32 0, %v136
  %v138 = vrot.slane %v133, %v137
  %140 = vmatprep.subr.mxu0 0.0
  %141 = vmatpush1.msra.mxu0 %v132
  %142 = vmatprep.subr.mxu0 0.0
  %143 = vmatpush1.msra.mxu0 %v131
  %144 = vmatprep.subr.mxu0 0.0
  %145 = vmatpush1.msra.mxu0 %v130
  %146 = vmatprep.subr.mxu0 0.0
  %147 = vmatpush1.msra.mxu0 %v129
  %148 = vmatprep.subr.mxu0 0.0
  %149 = vmatpush1.msra.mxu0 %v128
  %150 = vmatprep.subr.mxu0 0.0
  %151 = vmatpush1.msra.mxu0 %v127
  %152 = vmatprep.subr.mxu0 0.0
  %153 = vmatpush1.msra.mxu0 %v126
  %154 = vmatprep.subr.mxu0 0.0
  %155 = vmatpush1.msra.mxu0 %v125
  %156 = vmatprep.subr.mxu0 0.0
  %157 = vmatpush1.msra.mxu0 %v124
  %158 = vmatprep.subr.mxu0 0.0
  %159 = vmatpush1.msra.mxu0 %v123
  %160 = vmatprep.subr.mxu0 0.0
  %161 = vmatpush1.msra.mxu0 %v122
  %162 = vmatprep.subr.mxu0 0.0
  %163 = vmatpush1.msra.mxu0 %v121
  %164 = vmatprep.subr.mxu0 0.0
  %165 = vmatpush1.msra.mxu0 %v120
  %166 = vmatprep.subr.mxu0 0.0
  %167 = vmatpush1.msra.mxu0 %v119
  %168 = vmatprep.subr.mxu0 0.0
  %169 = vmatpush1.msra.mxu0 %v118
  %170 = vmatprep.subr.mxu0 0.0
  %171 = vmatpush1.msra.mxu0 %v117
  %172 = vmatprep.subr.mxu0 0.0
  %173 = vmatpush2.msra.mxu0 0.0
  %174 = vmatprep.subr.mxu0 0.0
  %175 = vmatpush2.msra.mxu0 0.0
  %176 = vmatprep.subr.mxu0 0.0
  %177 = vmatpush2.msra.mxu0 0.0
  %178 = vmatprep.subr.mxu0 0.0
  %179 = vmatpush2.msra.mxu0 0.0
  %180 = vmatprep.subr.mxu0 0.0
  %181 = vmatpush2.msra.mxu0 0.0
  %182 = vmatprep.subr.mxu0 0.0
  %183 = vmatpush2.msra.mxu0 0.0
  %184 = vmatprep.subr.mxu0 0.0
  %185 = vmatpush2.msra.mxu0 0.0
  %186 = vmatprep.subr.mxu0 0.0
  %187 = vmatpush2.msra.mxu0 0.0
  %188 = vmatprep.subr.mxu0 0.0
  %189 = vmatpush2.msra.mxu0 0.0
  %190 = vmatprep.subr.mxu0 0.0
  %191 = vmatpush2.msra.mxu0 0.0
  %192 = vmatprep.subr.mxu0 0.0
  %193 = vmatpush2.msra.mxu0 0.0
  %194 = vmatprep.subr.mxu0 0.0
  %195 = vmatpush2.msra.mxu0 0.0
  %196 = vmatprep.subr.mxu0 0.0
  %197 = vmatpush2.msra.mxu0 0.0
  %198 = vmatprep.subr.mxu0 0.0
  %199 = vmatpush2.msra.mxu0 0.0
  %200 = vmatprep.subr.mxu0 0.0
  %201 = vmatpush2.msra.mxu0 0.0
  %202 = vmatprep.subr.mxu0 0.0
  %203 = vmatpush2.msra.mxu0 0.0
  %204 = vmatprep.mubr.f32.mxu0 0.0
  %205 = vmatmul.mubr.f32.gmra.mxu0 %v116
  %v206 = vpop.f32.mrf.mxu0
  %v207 = vadd.f32 %v138, %v206
  %v208 = vpop.f32.mrf.mxu0
  %209 = vdwg.mxu0
  %v210 = vmax.f32 %v207, 0.0
  %v211 = vld [vmem:[%s5] sm:$0xff]
  %v212 = vld [vmem:[%s5 + $0x8] sm:$0xff]
  %v213 = vld [vmem:[%s5 + $0x10] sm:$0xff]
  %v214 = vld [vmem:[%s5 + $0x18] sm:$0xff]
  %v215 = vld [vmem:[%s5 + $0x20] sm:$0xff]
  %v216 = vld [vmem:[%s5 + $0x28] sm:$0xff]
  %v217 = vld [vmem:[%s5 + $0x30] sm:$0xff]
  %v218 = vld [vmem:[%s5 + $0x38] sm:$0xff]
  %v219 = vld [vmem:[%s5 + $0x40] sm:$0xff]
  %v220 = vld [vmem:[%s5 + $0x48] sm:$0xff]
  %v221 = vld [vmem:[%s5 + $0x50] sm:$0xff]
  %v222 = vld [vmem:[%s5 + $0x58] sm:$0xff]
  %v223 = vld [vmem:[%s5 + $0x60] sm:$0xff]
  %v224 = vld [vmem:[%s5 + $0x68] sm:$0xff]
  %v225 = vld [vmem:[%s5 + $0x70] sm:$0xff]
  %v226 = vld [vmem:[%s5 + $0x78] sm:$0xff]
  %v227 = vld [vmem:[%s6] sm:$0x1]
  %v229 = vlaneseq
  %v230 = vshrl.u32 %v229, 7
  %v231 = vsub.s32 0, %v230
  %v232 = vrot.slane %v227, %v231
  %234 = vmatprep.subr.mxu0 0.0
  %235 = vmatpush1.msra.mxu0 %v226
  %236 = vmatprep.subr.mxu0 0.0
  %237 = vmatpush1.msra.mxu0 %v225
  %238 = vmatprep.subr.mxu0 0.0
  %239 = vmatpush1.msra.mxu0 %v224
  %240 = vmatprep.subr.mxu0 0.0
  %241 = vmatpush1.msra.mxu0 %v223
  %242 = vmatprep.subr.mxu0 0.0
  %243 = vmatpush1.msra.mxu0 %v222
  %244 = vmatprep.subr.mxu0 0.0
  %245 = vmatpush1.msra.mxu0 %v221
  %246 = vmatprep.subr.mxu0 0.0
  %247 = vmatpush1.msra.mxu0 %v220
  %248 = vmatprep.subr.mxu0 0.0
  %249 = vmatpush1.msra.mxu0 %v219
  %250 = vmatprep.subr.mxu0 0.0
  %251 = vmatpush1.msra.mxu0 %v218
  %252 = vmatprep.subr.mxu0 0.0
  %253 = vmatpush1.msra.mxu0 %v217
  %254 = vmatprep.subr.mxu0 0.0
  %255 = vmatpush1.msra.mxu0 %v216
  %256 = vmatprep.subr.mxu0 0.0
  %257 = vmatpush1.msra.mxu0 %v215
  %258 = vmatprep.subr.mxu0 0.0
  %259 = vmatpush1.msra.mxu0 %v214
  %260 = vmatprep.subr.mxu0 0.0
  %261 = vmatpush1.msra.mxu0 %v213
  %262 = vmatprep.subr.mxu0 0.0
  %263 = vmatpush1.msra.mxu0 %v212
  %264 = vmatprep.subr.mxu0 0.0
  %265 = vmatpush1.msra.mxu0 %v211
  %266 = vmatprep.subr.mxu0 0.0
  %267 = vmatpush2.msra.mxu0 0.0
  %268 = vmatprep.subr.mxu0 0.0
  %269 = vmatpush2.msra.mxu0 0.0
  %270 = vmatprep.subr.mxu0 0.0
  %271 = vmatpush2.msra.mxu0 0.0
  %272 = vmatprep.subr.mxu0 0.0
  %273 = vmatpush2.msra.mxu0 0.0
  %274 = vmatprep.subr.mxu0 0.0
  %275 = vmatpush2.msra.mxu0 0.0
  %276 = vmatprep.subr.mxu0 0.0
  %277 = vmatpush2.msra.mxu0 0.0
  %278 = vmatprep.subr.mxu0 0.0
  %279 = vmatpush2.msra.mxu0 0.0
  %280 = vmatprep.subr.mxu0 0.0
  %281 = vmatpush2.msra.mxu0 0.0
  %282 = vmatprep.subr.mxu0 0.0
  %283 = vmatpush2.msra.mxu0 0.0
  %284 = vmatprep.subr.mxu0 0.0
  %285 = vmatpush2.msra.mxu0 0.0
  %286 = vmatprep.subr.mxu0 0.0
  %287 = vmatpush2.msra.mxu0 0.0
  %288 = vmatprep.subr.mxu0 0.0
  %289 = vmatpush2.msra.mxu0 0.0
  %290 = vmatprep.subr.mxu0 0.0
  %291 = vmatpush2.msra.mxu0 0.0
  %292 = vmatprep.subr.mxu0 0.0
  %293 = vmatpush2.msra.mxu0 0.0
  %294 = vmatprep.subr.mxu0 0.0
  %295 = vmatpush2.msra.mxu0 0.0
  %296 = vmatprep.subr.mxu0 0.0
  %297 = vmatpush2.msra.mxu0 0.0
  %298 = vmatprep.mubr.f32.mxu0 0.0
  %299 = vmatmul.mubr.f32.gmra.mxu0 %v210
  %v300 = vpop.f32.mrf.mxu0
  %v301 = vadd.f32 %v232, %v300
  %v302 = vpop.f32.mrf.mxu0
  %303 = vdwg.mxu0
  %304 = vst [vmem:[%s7] sm:$0xff] %v301
  // Predicated region
  $region30: #{quantity_mlp_forward.1} parent=0 // pred_check
    _
  $region31: #{quantity_mlp_forward.1} parent=0 // pred_check_branch
    %306 = sbr.rel (0) target = $region33
  $region32: #{quantity_mlp_forward.1} parent=0 // pred_region
    _
  $region33: #{quantity_mlp_forward.1} parent=0 // pred_fallthru
    _
  // Predicated region
  $region34: #{quantity_mlp_forward.1} parent=0 // pred_check
    _
  $region35: #{quantity_mlp_forward.1} parent=0 // pred_check_branch
    %308 = sbr.rel (0) target = $region37
  $region36: #{quantity_mlp_forward.1} parent=0 // pred_region
    _
  $region37: #{quantity_mlp_forward.1} parent=0 // pred_fallthru
    _

</llo_original>
